<compile_context>
chip_gen: v6e
topology: v6e:2x2x1
jax: 0.10.0
libtpu: 0.0.40
codegen_flags: <defaults>
</compile_context>

<pallas_src>
import functools
import itertools

import jax
import jax.numpy as jnp
import numpy as np
from jax.experimental import pallas as pl
from jax.experimental.pallas import tpu as pltpu

try:  # optional host-side exact solver
    from scipy.optimize import linear_sum_assignment as _scipy_lsa
except Exception:  # pragma: no cover
    _scipy_lsa = None


def _round_up(x, m):
    return ((x + m - 1) // m) * m


def _split_axis(total, max_blk, granule):
    """Split `total` (a multiple of `granule`) into equal blocks <= max_blk.

    Returns (block, padded_total) with block a multiple of `granule`,
    padded_total a multiple of block, and over-pad bounded by < granule per block.
    """
    if total <= max_blk:
        return total, total
    nblk = -(-total // max_blk)                       # cdiv
    blk = _round_up(-(-total // nblk), granule)
    return blk, blk * nblk


# Valid dummy box used to pad rows/columns (keeps union / enc_area > 0 in padding).
_PAD_BOX = (0.5, 0.5, 1.0, 1.0)


# ----------------------------------------------------------------------------
# Pallas kernel: matching cost for one (tm x tn) tile of one group's block.
#   pred_ref : (tm, 4)   [cx, cy, w, h] per prediction (sublane axis = pred idx)
#   tgt_t_ref: (4, tn)   transposed targets (lane axis = target idx)
#   out_ref  : (tm, tn)  cost tile  =  l1_weight * L1  -  giou_cost * GIoU
# ----------------------------------------------------------------------------
def _cost_kernel(pred_ref, tgt_t_ref, out_ref, *, l1_weight, giou_cost):
    tm, tn = out_ref.shape
    p = pred_ref[...]     # (tm, 4)
    t = tgt_t_ref[...]    # (4, tn)

    cx_p, cy_p, w_p, h_p = p[:, 0:1], p[:, 1:2], p[:, 2:3], p[:, 3:4]   # (tm, 1)
    cx_t, cy_t, w_t, h_t = t[0:1, :], t[1:2, :], t[2:3, :], t[3:4, :]   # (1, tn)

    cost = None

    # ---- L1 cdist (torch.cdist, p=1) -------------------------------- (tm, tn)
    if l1_weight != 0.0:
        l1 = (jnp.abs(cx_p - cx_t) + jnp.abs(cy_p - cy_t)
              + jnp.abs(w_p - w_t) + jnp.abs(h_p - h_t))
        cost = l1 if l1_weight == 1.0 else l1_weight * l1

    # ---- generalized IoU ------------------------------------------------------
    if giou_cost != 0.0:
        # center_to_corners_format (narrow forms)
        x0_pn = cx_p - 0.5 * w_p; x1_pn = cx_p + 0.5 * w_p     # (tm, 1)
        y0_pn = cy_p - 0.5 * h_p; y1_pn = cy_p + 0.5 * h_p
        x0_t = cx_t - 0.5 * w_t;  x1_t = cx_t + 0.5 * w_t      # (1, tn)
        y0_t = cy_t - 0.5 * h_t;  y1_t = cy_t + 0.5 * h_t

        area_p = (x1_pn - x0_pn) * (y1_pn - y0_pn)              # (tm, 1)
        area_t = (x1_t - x0_t) * (y1_t - y0_t)                  # (1, tn)

        # Hoist the pred-side lane broadcasts once per tile (each corner is
        # reused by both the intersection and the enclosing-box math).
        x0_p = jnp.broadcast_to(x0_pn, (tm, tn))
        x1_p = jnp.broadcast_to(x1_pn, (tm, tn))
        y0_p = jnp.broadcast_to(y0_pn, (tm, tn))
        y1_p = jnp.broadcast_to(y1_pn, (tm, tn))

        inter_w = jnp.maximum(jnp.minimum(x1_p, x1_t) - jnp.maximum(x0_p, x0_t), 0.0)
        inter_h = jnp.maximum(jnp.minimum(y1_p, y1_t) - jnp.maximum(y0_p, y0_t), 0.0)
        inter = inter_w * inter_h                                # (tm, tn)
        union = area_p + area_t - inter

        # Enclosing box; extents are >= 0 by construction, no clamp needed.
        enc_w = jnp.maximum(x1_p, x1_t) - jnp.minimum(x0_p, x0_t)
        enc_h = jnp.maximum(y1_p, y1_t) - jnp.minimum(y0_p, y0_t)
        enc_area = enc_w * enc_h

        # Exact divides (correctness);  giou = iou - (enc-union)/enc
        #                                    = iou + union/enc - 1
        iou = inter / union
        giou = iou + union / enc_area - 1.0

        g_term = giou_cost * giou
        cost = -g_term if cost is None else cost - g_term

    if cost is None:  # both weights zero (disallowed by the matcher itself)
        cost = jnp.zeros((tm, tn), jnp.float32)

    out_ref[...] = cost


# ----------------------------------------------------------------------------
# Wrapper: per-group diagonal cost blocks (G, tm_pad, tn_pad).
# Only block g's top-left (size_g x size_g) corner is meaningful.
# ----------------------------------------------------------------------------
def _build_group_slabs(boxes, sizes, pad_len):
    """Gather per-group rows of `boxes` into padded (G, pad_len, 4) slabs."""
    G = len(sizes)
    idx = np.zeros((G, pad_len), np.int32)
    valid = np.zeros((G, pad_len), np.bool_)
    start = 0
    for g, s in enumerate(sizes):
        if s > 0:
            idx[g, :s] = np.arange(start, start + s, dtype=np.int32)
            valid[g, :s] = True
        start += s
    gathered = jnp.take(boxes, jnp.asarray(idx), axis=0)          # (G, pad_len, 4)
    pad = jnp.asarray(_PAD_BOX, jnp.float32)
    return jnp.where(jnp.asarray(valid)[:, :, None], gathered, pad)


def compute_group_cost_blocks(pred_boxes, target_boxes, group_sizes, *,
                              bbox_cost=1.0, giou_cost=1.0,
                              max_tm=256, max_tn=2048):
    """Pallas-computed per-group cost blocks: bbox_cost * L1 - giou_cost * GIoU.

    Returns an array of shape (G, tm_pad, tn_pad); block g's valid region is
    [:group_sizes[g], :group_sizes[g]].
    """
    sizes = [int(s) for s in group_sizes]
    G = len(sizes)

    pred = jnp.asarray(pred_boxes).astype(jnp.float32)
    tgt = jnp.asarray(target_boxes).astype(jnp.float32)

    if G == 0:
        return jnp.zeros((0, 8, 128), jnp.float32)

    # Fold bbox_cost into the (N, 4) inputs (GIoU is scale-invariant under a
    # uniform scale of cx, cy, w, h); saves one multiply per output element.
    fold_bbox = float(bbox_cost) > 0.0
    if fold_bbox:
        scale = jnp.float32(bbox_cost)
        pred = pred * scale
        tgt = tgt * scale
    l1_weight = 1.0 if fold_bbox else float(bbox_cost)

    # Pad only to the (8, 128) hardware granule; split huge groups into
    # sub-blocks with bounded (< one granule per sub-block) over-pad.
    gmax = max(max(sizes), 1)
    tm_blk, tm_pad = _split_axis(_round_up(gmax, 8), max_tm, 8)
    tn_blk, tn_pad = _split_axis(_round_up(gmax, 128), max_tn, 128)

    pred_slab = _build_group_slabs(pred, sizes, tm_pad)            # (G, tm_pad, 4)
    tgt_slab = _build_group_slabs(tgt, sizes, tn_pad)              # (G, tn_pad, 4)
    tgt_slab_t = jnp.transpose(tgt_slab, (0, 2, 1))                # (G, 4, tn_pad)

    kernel = functools.partial(_cost_kernel,
                               l1_weight=l1_weight,
                               giou_cost=float(giou_cost))

    grid = (G, tm_pad // tm_blk, tn_pad // tn_blk)

    # VMEM budget sized from the actual tile footprint (out double-buffered +
    # elementwise intermediates), not a blanket 48 MiB.
    out_tile_bytes = tm_blk * tn_blk * 4
    vmem_limit = int(min(48 * 2**20, max(16 * 2**20, 18 * out_tile_bytes + 2 * 2**20)))

    cost_blocks = pl.pallas_call(
        kernel,
        out_shape=jax.ShapeDtypeStruct((G, tm_pad, tn_pad), jnp.float32),
        grid_spec=pltpu.PrefetchScalarGridSpec(
            num_scalar_prefetch=0,
            grid=grid,
            in_specs=[
                pl.BlockSpec((None, tm_blk, 4), lambda g, i, j: (g, i, 0)),
                pl.BlockSpec((None, 4, tn_blk), lambda g, i, j: (g, 0, j)),
            ],
            out_specs=pl.BlockSpec((None, tm_blk, tn_blk), lambda g, i, j: (g, i, j)),
        ),
        compiler_params=pltpu.CompilerParams(
            dimension_semantics=("parallel", "parallel", "parallel"),
            vmem_limit_bytes=vmem_limit),
    )(pred_slab, tgt_slab_t)

    return cost_blocks


# ----------------------------------------------------------------------------
# Host-side assignment (exact optimal; scipy when available, else brute force).
# ----------------------------------------------------------------------------
def _linear_sum_assignment_square(cost):
    # TODO(synk): scipy.optimize.linear_sum_assignment is inherently sequential /
    # host-side; no Pallas equivalent. Brute force is used only as a fallback.
    k = cost.shape[0]
    if k == 0:
        return np.zeros((0,), np.int64), np.zeros((0,), np.int64)
    if _scipy_lsa is not None:
        rows, cols = _scipy_lsa(cost)
        return np.asarray(rows, np.int64), np.asarray(cols, np.int64)
    best_perm, best_cost = None, None
    for perm in itertools.permutations(range(k)):
        c = sum(cost[i, perm[i]] for i in range(k))
        if best_cost is None or c < best_cost:
            best_cost, best_perm = c, perm
    return np.arange(k, dtype=np.int64), np.asarray(best_perm, dtype=np.int64)


class BoxDecoderGroupHungarianMatcher:
    def __init__(self, bbox_cost: float = 1.0, giou_cost: float = 1.0):
        if bbox_cost == 0 and giou_cost == 0:
            raise ValueError("All costs of the Box Matcher can't be 0")
        self.bbox_cost = bbox_cost
        self.giou_cost = giou_cost

    def __call__(self, pred_boxes, target_boxes, target_slices):
        sizes = [int(s) for s in target_slices]
        assert pred_boxes.shape[0] == target_boxes.shape[0]
        assert pred_boxes.shape[0] == sum(sizes)

        # Only the per-group diagonal blocks are ever needed by the matcher:
        # compute (and transfer) just those.
        blocks = compute_group_cost_blocks(
            pred_boxes, target_boxes, sizes,
            bbox_cost=self.bbox_cost, giou_cost=self.giou_cost)
        blocks_np = np.asarray(jax.block_until_ready(blocks))

        start = 0
        indices = []
        for g, s in enumerate(sizes):
            rows, cols = _linear_sum_assignment_square(blocks_np[g, :s, :s])
            indices.append((rows + start, cols + start))
            start += s
        return [(np.asarray(i, dtype=np.int64), np.asarray(j, dtype=np.int64))
                for i, j in indices]


# ----------------------------------------------------------------------------
# Reference (pure NumPy) for a correctness sanity-check of the cost matrix.
# ----------------------------------------------------------------------------
def _cost_matrix_ref(pred, tgt, bbox_cost=1.0, giou_cost=1.0):
    pred = np.asarray(pred, np.float32)
    tgt = np.asarray(tgt, np.float32)
    l1 = np.abs(pred[:, None, :] - tgt[None, :, :]).sum(-1)

    def corners(b):
        cx, cy, w, h = b[:, 0], b[:, 1], b[:, 2], b[:, 3]
        return np.stack([cx - 0.5 * w, cy - 0.5 * h, cx + 0.5 * w, cy + 0.5 * h], -1)

    bp, bt = corners(pred), corners(tgt)
    area_p = (bp[:, 2] - bp[:, 0]) * (bp[:, 3] - bp[:, 1])
    area_t = (bt[:, 2] - bt[:, 0]) * (bt[:, 3] - bt[:, 1])
    lt = np.maximum(bp[:, None, :2], bt[None, :, :2])
    rb = np.minimum(bp[:, None, 2:], bt[None, :, 2:])
    wh = np.clip(rb - lt, 0, None)
    inter = wh[..., 0] * wh[..., 1]
    union = area_p[:, None] + area_t[None, :] - inter
    iou = inter / union
    lt_e = np.minimum(bp[:, None, :2], bt[None, :, :2])
    rb_e = np.maximum(bp[:, None, 2:], bt[None, :, 2:])
    wh_e = np.clip(rb_e - lt_e, 0, None)
    enc = wh_e[..., 0] * wh_e[..., 1]
    giou = iou - (enc - union) / enc
    return bbox_cost * l1 - giou_cost * giou


if __name__ == "__main__":
    key = jax.random.PRNGKey(0)
    n = 16                       # total boxes = sum(target_slices)
    target_slices = [3, 5, 8]

    k1, k2, k3, k4 = jax.random.split(key, 4)
    pred_centers = jax.random.uniform(k1, (n, 2), minval=0.2, maxval=0.8)
    pred_sizes = jax.random.uniform(k2, (n, 2), minval=0.05, maxval=0.3)
    tgt_centers = jax.random.uniform(k3, (n, 2), minval=0.2, maxval=0.8)
    tgt_sizes = jax.random.uniform(k4, (n, 2), minval=0.05, maxval=0.3)
    pred_boxes = jnp.concatenate([pred_centers, pred_sizes], axis=-1)   # (16, 4) cxcywh
    target_boxes = jnp.concatenate([tgt_centers, tgt_sizes], axis=-1)   # (16, 4) cxcywh

    # Sanity-check the Pallas per-group cost blocks against a NumPy reference.
    blocks = jax.block_until_ready(
        compute_group_cost_blocks(pred_boxes, target_boxes, target_slices,
                                  bbox_cost=1.0, giou_cost=1.0))
    blocks_np = np.asarray(blocks)
    ref_full = _cost_matrix_ref(pred_boxes, target_boxes, 1.0, 1.0)
    start = 0
    for g, s in enumerate(target_slices):
        np.testing.assert_allclose(
            blocks_np[g, :s, :s], ref_full[start:start + s, start:start + s],
            rtol=1e-3, atol=1e-3)
        start += s

    matcher = BoxDecoderGroupHungarianMatcher(bbox_cost=1.0, giou_cost=1.0)
    indices = matcher(pred_boxes, target_boxes, target_slices)
    assert len(indices) == len(target_slices)

    # Check the assignments are (within tolerance) optimal on the reference cost.
    start = 0
    for (i_idx, j_idx), s in zip(indices, target_slices):
        assert len(i_idx) == len(j_idx) == s
        assert i_idx.dtype == np.int64 and j_idx.dtype == np.int64
        assert np.all(i_idx >= start) and np.all(i_idx < start + s)
        assert np.all(j_idx >= start) and np.all(j_idx < start + s)
        r_rows, r_cols = _linear_sum_assignment_square(
            ref_full[start:start + s, start:start + s])
        opt_cost = ref_full[r_rows + start, r_cols + start].sum()
        got_cost = ref_full[i_idx, j_idx].sum()
        assert abs(got_cost - opt_cost) <= 1e-3 * max(1, s)
        start += s

    print("KERNEL_OK")
</pallas_src>

<mosaic_0001>
module attributes {stable_mosaic.version = 11 : i64} {
  func.func @_cost_kernel(%arg0: i32, %arg1: i32, %arg2: i32, %arg3: memref<1x8x4xf32, #tpu.memory_space<vmem>>, %arg4: memref<1x4x128xf32, #tpu.memory_space<vmem>>, %arg5: memref<1x8x128xf32, #tpu.memory_space<vmem>>) attributes {dimension_semantics = [#tpu.dimension_semantics<parallel>, #tpu.dimension_semantics<parallel>, #tpu.dimension_semantics<parallel>], iteration_bounds = array<i64: 3, 1, 1>, scalar_prefetch = 0 : i64, scratch_operands = 0 : i64, tpu.core_type = #tpu.core_type<tc>, window_params = [{transform_indices = @transform_0, window_bounds = array<i64: 1, 8, 4>}, {transform_indices = @transform_1, window_bounds = array<i64: 1, 4, 128>}, {transform_indices = @transform_2, window_bounds = array<i64: 1, 8, 128>}]} {
    %c0 = arith.constant 0 : index
    %c0_0 = arith.constant 0 : index
    %c0_1 = arith.constant 0 : index
    %0 = vector.load %arg3[%c0, %c0_0, %c0_1] : memref<1x8x4xf32, #tpu.memory_space<vmem>>, vector<1x8x4xf32>
    %1 = vector.shape_cast %0 : vector<1x8x4xf32> to vector<8x4xf32>
    %c0_2 = arith.constant 0 : index
    %c0_3 = arith.constant 0 : index
    %c0_4 = arith.constant 0 : index
    %2 = vector.load %arg4[%c0_2, %c0_3, %c0_4] : memref<1x4x128xf32, #tpu.memory_space<vmem>>, vector<1x4x128xf32>
    %3 = vector.shape_cast %2 : vector<1x4x128xf32> to vector<4x128xf32>
    %4 = vector.extract_strided_slice %1 {offsets = [0, 0], sizes = [8, 1], strides = [1, 1]} : vector<8x4xf32> to vector<8x1xf32>
    %5 = vector.extract_strided_slice %1 {offsets = [0, 1], sizes = [8, 1], strides = [1, 1]} : vector<8x4xf32> to vector<8x1xf32>
    %6 = vector.extract_strided_slice %1 {offsets = [0, 2], sizes = [8, 1], strides = [1, 1]} : vector<8x4xf32> to vector<8x1xf32>
    %7 = vector.extract_strided_slice %1 {offsets = [0, 3], sizes = [8, 1], strides = [1, 1]} : vector<8x4xf32> to vector<8x1xf32>
    %8 = vector.extract_strided_slice %3 {offsets = [0, 0], sizes = [1, 128], strides = [1, 1]} : vector<4x128xf32> to vector<1x128xf32>
    %9 = vector.extract_strided_slice %3 {offsets = [1, 0], sizes = [1, 128], strides = [1, 1]} : vector<4x128xf32> to vector<1x128xf32>
    %10 = vector.extract_strided_slice %3 {offsets = [2, 0], sizes = [1, 128], strides = [1, 1]} : vector<4x128xf32> to vector<1x128xf32>
    %11 = vector.extract_strided_slice %3 {offsets = [3, 0], sizes = [1, 128], strides = [1, 1]} : vector<4x128xf32> to vector<1x128xf32>
    %12 = vector.broadcast %4 : vector<8x1xf32> to vector<8x128xf32>
    %13 = vector.broadcast %8 : vector<1x128xf32> to vector<8x128xf32>
    %14 = arith.subf %12, %13 : vector<8x128xf32>
    %15 = math.absf %14 : vector<8x128xf32>
    %16 = vector.broadcast %5 : vector<8x1xf32> to vector<8x128xf32>
    %17 = vector.broadcast %9 : vector<1x128xf32> to vector<8x128xf32>
    %18 = arith.subf %16, %17 : vector<8x128xf32>
    %19 = math.absf %18 : vector<8x128xf32>
    %20 = arith.addf %15, %19 : vector<8x128xf32>
    %21 = vector.broadcast %6 : vector<8x1xf32> to vector<8x128xf32>
    %22 = vector.broadcast %10 : vector<1x128xf32> to vector<8x128xf32>
    %23 = arith.subf %21, %22 : vector<8x128xf32>
    %24 = math.absf %23 : vector<8x128xf32>
    %25 = arith.addf %20, %24 : vector<8x128xf32>
    %26 = vector.broadcast %7 : vector<8x1xf32> to vector<8x128xf32>
    %27 = vector.broadcast %11 : vector<1x128xf32> to vector<8x128xf32>
    %28 = arith.subf %26, %27 : vector<8x128xf32>
    %29 = math.absf %28 : vector<8x128xf32>
    %30 = arith.addf %25, %29 : vector<8x128xf32>
    %cst = arith.constant 5.000000e-01 : f32
    %31 = vector.broadcast %cst : f32 to vector<8x1xf32>
    %32 = arith.mulf %31, %6 : vector<8x1xf32>
    %33 = arith.subf %4, %32 : vector<8x1xf32>
    %cst_5 = arith.constant 5.000000e-01 : f32
    %34 = vector.broadcast %cst_5 : f32 to vector<8x1xf32>
    %35 = arith.mulf %34, %6 : vector<8x1xf32>
    %36 = arith.addf %4, %35 : vector<8x1xf32>
    %cst_6 = arith.constant 5.000000e-01 : f32
    %37 = vector.broadcast %cst_6 : f32 to vector<8x1xf32>
    %38 = arith.mulf %37, %7 : vector<8x1xf32>
    %39 = arith.subf %5, %38 : vector<8x1xf32>
    %cst_7 = arith.constant 5.000000e-01 : f32
    %40 = vector.broadcast %cst_7 : f32 to vector<8x1xf32>
    %41 = arith.mulf %40, %7 : vector<8x1xf32>
    %42 = arith.addf %5, %41 : vector<8x1xf32>
    %cst_8 = arith.constant 5.000000e-01 : f32
    %43 = vector.broadcast %cst_8 : f32 to vector<1x128xf32>
    %44 = arith.mulf %43, %10 : vector<1x128xf32>
    %45 = arith.subf %8, %44 : vector<1x128xf32>
    %cst_9 = arith.constant 5.000000e-01 : f32
    %46 = vector.broadcast %cst_9 : f32 to vector<1x128xf32>
    %47 = arith.mulf %46, %10 : vector<1x128xf32>
    %48 = arith.addf %8, %47 : vector<1x128xf32>
    %cst_10 = arith.constant 5.000000e-01 : f32
    %49 = vector.broadcast %cst_10 : f32 to vector<1x128xf32>
    %50 = arith.mulf %49, %11 : vector<1x128xf32>
    %51 = arith.subf %9, %50 : vector<1x128xf32>
    %cst_11 = arith.constant 5.000000e-01 : f32
    %52 = vector.broadcast %cst_11 : f32 to vector<1x128xf32>
    %53 = arith.mulf %52, %11 : vector<1x128xf32>
    %54 = arith.addf %9, %53 : vector<1x128xf32>
    %55 = arith.subf %36, %33 : vector<8x1xf32>
    %56 = arith.subf %42, %39 : vector<8x1xf32>
    %57 = arith.mulf %55, %56 : vector<8x1xf32>
    %58 = arith.subf %48, %45 : vector<1x128xf32>
    %59 = arith.subf %54, %51 : vector<1x128xf32>
    %60 = arith.mulf %58, %59 : vector<1x128xf32>
    %61 = vector.shape_cast %33 : vector<8x1xf32> to vector<8x1xf32>
    %62 = vector.broadcast %61 : vector<8x1xf32> to vector<8x128xf32>
    %63 = vector.shape_cast %36 : vector<8x1xf32> to vector<8x1xf32>
    %64 = vector.broadcast %63 : vector<8x1xf32> to vector<8x128xf32>
    %65 = vector.shape_cast %39 : vector<8x1xf32> to vector<8x1xf32>
    %66 = vector.broadcast %65 : vector<8x1xf32> to vector<8x128xf32>
    %67 = vector.shape_cast %42 : vector<8x1xf32> to vector<8x1xf32>
    %68 = vector.broadcast %67 : vector<8x1xf32> to vector<8x128xf32>
    %69 = vector.broadcast %48 : vector<1x128xf32> to vector<8x128xf32>
    %70 = arith.minimumf %64, %69 : vector<8x128xf32>
    %71 = vector.broadcast %45 : vector<1x128xf32> to vector<8x128xf32>
    %72 = arith.maximumf %62, %71 : vector<8x128xf32>
    %73 = arith.subf %70, %72 : vector<8x128xf32>
    %cst_12 = arith.constant 0.000000e+00 : f32
    %74 = vector.broadcast %cst_12 : f32 to vector<8x128xf32>
    %75 = arith.maximumf %73, %74 : vector<8x128xf32>
    %76 = vector.broadcast %54 : vector<1x128xf32> to vector<8x128xf32>
    %77 = arith.minimumf %68, %76 : vector<8x128xf32>
    %78 = vector.broadcast %51 : vector<1x128xf32> to vector<8x128xf32>
    %79 = arith.maximumf %66, %78 : vector<8x128xf32>
    %80 = arith.subf %77, %79 : vector<8x128xf32>
    %cst_13 = arith.constant 0.000000e+00 : f32
    %81 = vector.broadcast %cst_13 : f32 to vector<8x128xf32>
    %82 = arith.maximumf %80, %81 : vector<8x128xf32>
    %83 = arith.mulf %75, %82 : vector<8x128xf32>
    %84 = vector.broadcast %57 : vector<8x1xf32> to vector<8x128xf32>
    %85 = vector.broadcast %60 : vector<1x128xf32> to vector<8x128xf32>
    %86 = arith.addf %84, %85 : vector<8x128xf32>
    %87 = arith.subf %86, %83 : vector<8x128xf32>
    %88 = vector.broadcast %48 : vector<1x128xf32> to vector<8x128xf32>
    %89 = arith.maximumf %64, %88 : vector<8x128xf32>
    %90 = vector.broadcast %45 : vector<1x128xf32> to vector<8x128xf32>
    %91 = arith.minimumf %62, %90 : vector<8x128xf32>
    %92 = arith.subf %89, %91 : vector<8x128xf32>
    %93 = vector.broadcast %54 : vector<1x128xf32> to vector<8x128xf32>
    %94 = arith.maximumf %68, %93 : vector<8x128xf32>
    %95 = vector.broadcast %51 : vector<1x128xf32> to vector<8x128xf32>
    %96 = arith.minimumf %66, %95 : vector<8x128xf32>
    %97 = arith.subf %94, %96 : vector<8x128xf32>
    %98 = arith.mulf %92, %97 : vector<8x128xf32>
    %99 = arith.divf %83, %87 : vector<8x128xf32>
    %100 = arith.divf %87, %98 : vector<8x128xf32>
    %101 = arith.addf %99, %100 : vector<8x128xf32>
    %cst_14 = arith.constant 1.000000e+00 : f32
    %102 = vector.broadcast %cst_14 : f32 to vector<8x128xf32>
    %103 = arith.subf %101, %102 : vector<8x128xf32>
    %cst_15 = arith.constant 1.000000e+00 : f32
    %104 = vector.broadcast %cst_15 : f32 to vector<8x128xf32>
    %105 = arith.mulf %104, %103 : vector<8x128xf32>
    %106 = arith.subf %30, %105 : vector<8x128xf32>
    %c0_16 = arith.constant 0 : index
    %c0_17 = arith.constant 0 : index
    %c0_18 = arith.constant 0 : index
    %107 = vector.load %arg5[%c0_16, %c0_17, %c0_18] : memref<1x8x128xf32, #tpu.memory_space<vmem>>, vector<1x8x128xf32>
    %108 = vector.shape_cast %107 : vector<1x8x128xf32> to vector<8x128xf32>
    %109 = vector.shape_cast %106 : vector<8x128xf32> to vector<1x8x128xf32>
    tpu.vector_store %arg5[%c0_16, %c0_17, %c0_18], %109 {strides = array<i32>} : memref<1x8x128xf32, #tpu.memory_space<vmem>>, vector<1x8x128xf32>,
    return
  }
  func.func @transform_0(%arg0: i32, %arg1: i32, %arg2: i32) -> (i32, i32, i32) {
    %c0_i32 = arith.constant 0 : i32
    %c0_i32_0 = arith.constant 0 : i32
    return %arg0, %arg1, %c0_i32 : i32, i32, i32
  }
  func.func @transform_1(%arg0: i32, %arg1: i32, %arg2: i32) -> (i32, i32, i32) {
    %c0_i32 = arith.constant 0 : i32
    %c0_i32_0 = arith.constant 0 : i32
    return %arg0, %c0_i32, %arg2 : i32, i32, i32
  }
  func.func @transform_2(%arg0: i32, %arg1: i32, %arg2: i32) -> (i32, i32, i32) {
    %c0_i32 = arith.constant 0 : i32
    return %arg0, %arg1, %arg2 : i32, i32, i32
  }
}

</mosaic_0001>

<llo_original>
// kernel: tpu_custom_call.1
$region0: #{tpu_custom_call.1}
  #allocation0 [shape = 'u32[]', space=smem, size = 0x4, offset = 0x4, fixed_abs, tag = 'smem constant byte address 0x4 - core index']
  #allocation1 [shape = 'u32[144,128]{1,0:T(1,128)}', space=vmem, size = 0x12000, scoped, tag = 'internal scratch']
  %s0 = inlined_call_operand.vmem [shape: f32[3,8,4], index: 0, kind: input, shape index: {}]
  %s1 = inlined_call_operand.vmem [shape: f32[3,4,128], index: 1, kind: input, shape index: {}]
  %s2 = inlined_call_operand.hbm [shape: f32[3,8,128], index: 2, kind: output, shape index: {}]
  %s3 = sld [smem:[#allocation0]]
  $region41: #{tpu_custom_call.1} parent=0
    _
  %s5 = ssub.s32 1, %s3
  %s6 = scalar_select 0, %s5, %s3
  $region1: #{tpu_custom_call.1} parent=0
    #allocation2 [shape = 'u8[8192]{0}', space=vmem, size = 0x2000, scoped, tag = 'output window, operand 0']
    #allocation3 [shape = 's32[2]{0}', space=sflag, size = 0x8, scoped, tag = 'scoped memory for tpu_custom_call.1']
    %7 = vsyncpa [#allocation3], 0
    %s8 = scalar_lea.sflag [#allocation3], 1
    %9 = vsyncpa %s8, 0
    loop: start=0, step=1, limit=5
    $region2: #{tpu_custom_call.1} parent=1 // loop_pre_header
      _
    $region3: #{tpu_custom_call.1} parent=1 // loop_header
      %s11 = sphi 0, %s15
      %p12 = scmp.ge.s32.totalorder %s11, 5
      %s18 = sphi 0, %s37
      %s19 = sphi 0, %s33
      %s20 = sphi 0, %s29
      %s21 = sphi 0, %s18
      %s22 = sphi 0, %s19
      %s23 = sphi 0, %s20
      %s24 = sphi 0, %s21
      %s25 = sphi 0, %s22
      %s26 = sphi 0, %s23
      %s42 = sphi 0, %s44
      %s45 = sphi 0, %s42
      %s46 = sphi 0, %s45
      %s62 = sphi 0, %s46
      %s70 = sphi 0, %s72
      %s73 = sphi 0, %s70
      %s74 = sphi 0, %s73
      %s90 = sphi 0, %s74
      %s100 = sphi 0, %s102
      %s103 = sphi 0, %s100
      %s104 = sphi 0, %s103
      %s120 = sphi 0, %s104
    $region4: #{tpu_custom_call.1} parent=1 // loop_header_branch
      %14 = sbr.rel (%p12) target = $region8
    $region5: #{tpu_custom_call.1} parent=1 // loop_body
      %s16 = ssub.s32 %s11, 1
      %s17 = ssub.s32 %s11, 2
      %s27 = sadd.s32 1, %s20
      %p28 = scmp.ge.s32.totalorder %s27, 1
      %s29 = scalar_select %p28, 0, %s27
      %s30 = sadd.s32 1, %s19
      %s31 = scalar_select %p28, %s30, %s19
      %p32 = scmp.ge.s32.totalorder %s31, 1
      %s33 = scalar_select %p32, 0, %s31
      %s34 = sadd.s32 1, %s18
      %s35 = scalar_select %p32, %s34, %s18
      %p36 = scmp.ge.s32.totalorder %s35, 3
      %s37 = scalar_select %p36, 0, %s35
      %s38 = ssub.s32 %s18, %s37
      %s39 = ssub.s32 %s19, %s33
      %s40 = sor.u32 %s38, %s39
      %p41 = scmp.eq.s32.totalorder %s40, 0
      %s43 = sadd.s32 %s42, 1
      %s44 = scalar_select %p41, %s42, %s43
      %p47 = pneg %p41
      %p48 = scmp.eq.s32.totalorder %s11, 2
      %p49 = por %p47, %p48
      %p50 = scmp.ne.s32.totalorder %s42, %s45
      %p51 = scmp.eq.s32.totalorder %s11, 0
      %p52 = por %p50, %p51
      %p53 = scmp.ne.s32.totalorder %s42, %s45
      %p54 = scmp.eq.s32.totalorder %s16, 2
      %p55 = por %p53, %p54
      %p56 = scmp.ne.s32.totalorder %s45, %s46
      %p57 = scmp.eq.s32.totalorder %s16, 0
      %p58 = por %p56, %p57
      %p59 = scmp.ne.s32.totalorder %s45, %s46
      %p60 = scmp.eq.s32.totalorder %s17, 2
      %p61 = por %p59, %p60
      %p63 = scmp.ne.s32.totalorder %s46, %s62
      %p64 = scmp.eq.s32.totalorder %s17, 0
      %p65 = por %p63, %p64
      %s66 = ssub.s32 %s18, %s37
      %s67 = ssub.s32 %s20, %s29
      %s68 = sor.u32 %s66, %s67
      %p69 = scmp.eq.s32.totalorder %s68, 0
      %s71 = sadd.s32 %s70, 1
      %s72 = scalar_select %p69, %s70, %s71
      %p75 = pneg %p69
      %p76 = scmp.eq.s32.totalorder %s11, 2
      %p77 = por %p75, %p76
      %p78 = scmp.ne.s32.totalorder %s70, %s73
      %p79 = scmp.eq.s32.totalorder %s11, 0
      %p80 = por %p78, %p79
      %p81 = scmp.ne.s32.totalorder %s70, %s73
      %p82 = scmp.eq.s32.totalorder %s16, 2
      %p83 = por %p81, %p82
      %p84 = scmp.ne.s32.totalorder %s73, %s74
      %p85 = scmp.eq.s32.totalorder %s16, 0
      %p86 = por %p84, %p85
      %p87 = scmp.ne.s32.totalorder %s73, %s74
      %p88 = scmp.eq.s32.totalorder %s17, 2
      %p89 = por %p87, %p88
      %p91 = scmp.ne.s32.totalorder %s74, %s90
      %p92 = scmp.eq.s32.totalorder %s17, 0
      %p93 = por %p91, %p92
      %s94 = ssub.s32 %s18, %s37
      %s95 = ssub.s32 %s19, %s33
      %s96 = sor.u32 %s94, %s95
      %s97 = ssub.s32 %s20, %s29
      %s98 = sor.u32 %s96, %s97
      %p99 = scmp.eq.s32.totalorder %s98, 0
      %s101 = sadd.s32 %s100, 1
      %s102 = scalar_select %p99, %s100, %s101
      %p105 = pneg %p99
      %p106 = scmp.eq.s32.totalorder %s11, 2
      %p107 = por %p105, %p106
      %p108 = scmp.ne.s32.totalorder %s100, %s103
      %p109 = scmp.eq.s32.totalorder %s11, 0
      %p110 = por %p108, %p109
      %p111 = scmp.ne.s32.totalorder %s100, %s103
      %p112 = scmp.eq.s32.totalorder %s16, 2
      %p113 = por %p111, %p112
      %p114 = scmp.ne.s32.totalorder %s103, %s104
      %p115 = scmp.eq.s32.totalorder %s16, 0
      %p116 = por %p114, %p115
      %p117 = scmp.ne.s32.totalorder %s103, %s104
      %p118 = scmp.eq.s32.totalorder %s17, 2
      %p119 = por %p117, %p118
      %p121 = scmp.ne.s32.totalorder %s104, %s120
      %p122 = scmp.eq.s32.totalorder %s17, 0
      %p123 = por %p121, %p122
      %p124 = scmp.le.s32.totalorder 1, %s11
      %p125 = scmp.lt.s32.totalorder %s11, 4
      %p126 = pnand %p124, %p125
      %p127 = pneg %p126
      // Predicated region
      $region9: #{tpu_custom_call.1} parent=5 // pred_check
        _
      $region10: #{tpu_custom_call.1} parent=5 // pred_check_branch
        %129 = sbr.rel (%p126) target = $region12
      $region11: #{tpu_custom_call.1} parent=5 // pred_region
        %s130 = ssub.s32 %s11, 1
      $region12: #{tpu_custom_call.1} parent=5 // pred_fallthru
        _
      %p131 = scmp.lt.s32.totalorder %s11, 3
      // Predicated region
      $region13: #{tpu_custom_call.1} parent=5 // pred_check
        %p132 = pneg %p131
      $region14: #{tpu_custom_call.1} parent=5 // pred_check_branch
        %134 = sbr.rel (%p132) target = $region16
      $region15: #{tpu_custom_call.1} parent=5 // pred_region
        // Predicated region
        $region17: #{tpu_custom_call.1} parent=15 // pred_check
          %p135 = pneg %p52
        $region18: #{tpu_custom_call.1} parent=15 // pred_check_branch
          %137 = sbr.rel (%p135) target = $region20
        $region19: #{tpu_custom_call.1} parent=15 // pred_region
          %p138 = scmp.lt.s32.totalorder %s18, 2
          %s139 = scalar_select %p138, %s18, 2
          %p140 = scmp.lt.s32.totalorder %s19, 0
          %s141 = scalar_select %p140, %s19, 0
          %s142 = sadd.s32 %s141, %s139
          %s143 = smul.addr %s142, 8
          %s144 = scalar_lea.vmem %s0, %s143
        $region20: #{tpu_custom_call.1} parent=15 // pred_fallthru
          _
        // Predicated region
        $region21: #{tpu_custom_call.1} parent=15 // pred_check
          %p145 = pneg %p80
        $region22: #{tpu_custom_call.1} parent=15 // pred_check_branch
          %147 = sbr.rel (%p145) target = $region24
        $region23: #{tpu_custom_call.1} parent=15 // pred_region
          %p148 = scmp.lt.s32.totalorder %s18, 2
          %s149 = scalar_select %p148, %s18, 2
          %p150 = scmp.lt.s32.totalorder %s20, 0
          %s151 = scalar_select %p150, %s20, 0
          %s152 = sadd.s32 %s151, %s149
          %s153 = smul.addr %s152, 4
          %s154 = scalar_lea.vmem %s1, %s153
        $region24: #{tpu_custom_call.1} parent=15 // pred_fallthru
          _
      $region16: #{tpu_custom_call.1} parent=5 // pred_fallthru
        _
      %p155 = scmp.le.s32.totalorder 1, %s11
      %p156 = scmp.lt.s32.totalorder %s11, 4
      %p157 = pnand %p155, %p156
      %p158 = pneg %p157
      // Predicated region
      $region25: #{tpu_custom_call.1} parent=5 // pred_check
        _
      $region26: #{tpu_custom_call.1} parent=5 // pred_check_branch
        %160 = sbr.rel (%p157) target = $region28
      $region27: #{tpu_custom_call.1} parent=5 // pred_region
        %s161 = ssub.s32 %s11, 1
        %p162 = scmp.lt.s32.totalorder %s21, 2
        %s163 = scalar_select %p162, %s21, 2
        %p164 = scmp.lt.s32.totalorder %s22, 0
        %s165 = scalar_select %p164, %s22, 0
        %s166 = sadd.s32 %s165, %s163
        %s167 = smul.addr %s166, 8
        %s168 = scalar_lea.vmem %s0, %s167
        %p169 = pneg %p58
        %p170 = pneg %p55
        %p171 = scmp.lt.s32.totalorder %s21, 2
        %s172 = scalar_select %p171, %s21, 2
        %p173 = scmp.lt.s32.totalorder %s23, 0
        %s174 = scalar_select %p173, %s23, 0
        %s175 = sadd.s32 %s174, %s172
        %s176 = smul.addr %s175, 4
        %s177 = scalar_lea.vmem %s1, %s176
        %p178 = pneg %p86
        %p179 = pneg %p83
        %p180 = pneg %p116
        %p181 = pneg %p113
        %s182 = sand.u32 %s103, 1
        %s183 = scalar_lea.sflag [#allocation3], %s182
        %s184 = sand.u32 %s103, 1
        %s185 = smul.addr %s184, 8
        %s186 = scalar_lea.vmem [#allocation2], %s185
        %p187 = scmp.lt.s32.totalorder %s21, 2
        %s188 = scalar_select %p187, %s21, 2
        %p189 = scmp.lt.s32.totalorder %s22, 0
        %s190 = scalar_select %p189, %s22, 0
        %s191 = sadd.s32 %s190, %s188
        %s192 = smul.addr %s191, 8
        %s193 = scalar_lea.vmem %s0, %s192
        %p194 = scmp.lt.s32.totalorder %s21, 2
        %s195 = scalar_select %p194, %s21, 2
        %p196 = scmp.lt.s32.totalorder %s23, 0
        %s197 = scalar_select %p196, %s23, 0
        %s198 = sadd.s32 %s197, %s195
        %s199 = smul.addr %s198, 4
        %s200 = scalar_lea.vmem %s1, %s199
        %v201 = vld [vmem:[%s193] sm:$0xff]
        %v202 = vld [vmem:[%s200] sm:$0xf]
        %204 = vset.pattern.permute.xlu0 0
        %205 = vperm.xlu0 %204, %v201
        %v206 = vpop.permute.xlu0 %205
        %v208 = vlaneseq
        %v209 = vshrl.u32 %v208, 7
        %v210 = vsub.s32 0, %v209
        %v211 = vrot.slane %v202, %v210
        %v212 = vsub.f32 %v206, %v211
        %v213 = vand.u32 2147483647, %v212
        %214 = vset.pattern.permute.xlu0 1
        %215 = vperm.xlu0 %214, %v201
        %v216 = vpop.permute.xlu0 %215
        %v218 = vlaneseq
        %v219 = vshrl.u32 %v218, 7
        %v220 = vsub.s32 1, %v219
        %v221 = vrot.slane %v202, %v220
        %v222 = vsub.f32 %v216, %v221
        %v223 = vand.u32 2147483647, %v222
        %v224 = vadd.f32 %v213, %v223
        %225 = vset.pattern.permute.xlu0 2
        %226 = vperm.xlu0 %225, %v201
        %v227 = vpop.permute.xlu0 %226
        %v229 = vlaneseq
        %v230 = vshrl.u32 %v229, 7
        %v231 = vsub.s32 2, %v230
        %v232 = vrot.slane %v202, %v231
        %v233 = vsub.f32 %v227, %v232
        %v234 = vand.u32 2147483647, %v233
        %v235 = vadd.f32 %v224, %v234
        %236 = vset.pattern.permute.xlu0 3
        %237 = vperm.xlu0 %236, %v201
        %v238 = vpop.permute.xlu0 %237
        %v240 = vlaneseq
        %v241 = vshrl.u32 %v240, 7
        %v242 = vsub.s32 3, %v241
        %v243 = vrot.slane %v202, %v242
        %v244 = vsub.f32 %v238, %v243
        %v245 = vand.u32 2147483647, %v244
        %v246 = vadd.f32 %v235, %v245
        %v247 = vmul.f32 %v201, 0.5
        %249 = vrot.lane.b32.xlu0 %v247, 126
        %v250 = vpop.permute.xlu0 %249
        %v252 = vsub.f32 %v201, %v250
        %v253 = vadd.f32 %v201, %v250
        %v254 = vmul.f32 %v202, 0.5
        %v256 = vrot.slane %v254, 2
        %v258 = vsub.f32 %v202, %v256
        %v259 = vadd.f32 %v202, %v256
        %v260 = vsub.f32 %v253, %v252
        %262 = vrot.lane.b32.xlu0 %v260, 127
        %v263 = vpop.permute.xlu0 %262
        %v265 = vmul.f32 %v260, %v263
        %v266 = vsub.f32 %v259, %v258
        %v268 = vrot.slane %v266, 1
        %v270 = vmul.f32 %v266, %v268
        %272 = vset.pattern.permute.xlu0 0
        %273 = vperm.xlu0 %272, %v252
        %v274 = vpop.permute.xlu0 %273
        %277 = vset.pattern.permute.xlu0 0
        %278 = vperm.xlu0 %277, %v253
        %v279 = vpop.permute.xlu0 %278
        %281 = vset.pattern.permute.xlu0 1
        %282 = vperm.xlu0 %281, %v252
        %v283 = vpop.permute.xlu0 %282
        %285 = vset.pattern.permute.xlu0 1
        %286 = vperm.xlu0 %285, %v253
        %v287 = vpop.permute.xlu0 %286
        %v289 = vlaneseq
        %v290 = vshrl.u32 %v289, 7
        %v291 = vsub.s32 0, %v290
        %v292 = vrot.slane %v259, %v291
        %v293 = vmin.f32 %v279, %v292
        %v294 = vlaneseq
        %v295 = vshrl.u32 %v294, 7
        %v296 = vsub.s32 0, %v295
        %v297 = vrot.slane %v258, %v296
        %v298 = vmax.f32 %v274, %v297
        %v299 = vsub.f32 %v293, %v298
        %v300 = vmax.f32 %v299, 0.0
        %v301 = vlaneseq
        %v302 = vshrl.u32 %v301, 7
        %v303 = vsub.s32 1, %v302
        %v304 = vrot.slane %v259, %v303
        %v305 = vmin.f32 %v287, %v304
        %v306 = vlaneseq
        %v307 = vshrl.u32 %v306, 7
        %v308 = vsub.s32 1, %v307
        %v309 = vrot.slane %v258, %v308
        %v310 = vmax.f32 %v283, %v309
        %v311 = vsub.f32 %v305, %v310
        %v312 = vmax.f32 %v311, 0.0
        %v313 = vmul.f32 %v300, %v312
        %315 = vset.pattern.permute.xlu0 0
        %316 = vperm.xlu0 %315, %v265
        %v317 = vpop.permute.xlu0 %316
        %v319 = vlaneseq
        %v320 = vshrl.u32 %v319, 7
        %v321 = vsub.s32 0, %v320
        %v322 = vrot.slane %v270, %v321
        %v323 = vadd.f32 %v317, %v322
        %v324 = vsub.f32 %v323, %v313
        %v325 = vmax.f32 %v279, %v292
        %v326 = vmin.f32 %v274, %v297
        %v327 = vsub.f32 %v325, %v326
        %v328 = vmax.f32 %v287, %v304
        %v329 = vmin.f32 %v283, %v309
        %v330 = vsub.f32 %v328, %v329
        %v331 = vmul.f32 %v327, %v330
        %v332 = vrcp.pop %v324
        %v333 = vmul.f32 %v313, %v332
        %v334 = vrcp.pop %v331
        %v335 = vmul.f32 %v324, %v334
        %v336 = vadd.f32 %v333, %v335
        %v337 = vsub.f32 %v336, 1.0
        %v338 = vsub.f32 %v246, %v337
        %339 = vst [vmem:[%s186] sm:$0xff] %v338
        %s340 = sand.u32 %s103, 1
        %s341 = scalar_lea.sflag [#allocation3], %s340
        %s342 = sand.u32 %s103, 1
        %s343 = smul.addr %s342, 8
        %s344 = scalar_lea.vmem [#allocation2], %s343
        // Predicated region
        $region29: #{tpu_custom_call.1} parent=27 // pred_check
          %p345 = pneg %p113
        $region30: #{tpu_custom_call.1} parent=27 // pred_check_branch
          %347 = sbr.rel (%p345) target = $region32
        $region31: #{tpu_custom_call.1} parent=27 // pred_region
          %s349 = ssub.s32 128, 128
          %350 = vsyncadd %s341, %s349
          %s351 = sadd.s32 %s23, %s22
          %s352 = sadd.s32 %s351, %s21
          %s353 = smul.addr %s352, 128
          %s354 = scalar_lea.hbm %s2, %s353
          %s356 = sshll.u32 %s344, 4
          %s357 = int_to_ptr.vmem [resolvable:$true] %s356
          %359 = dma.vmem_to_hbm [thread:$0]  %s357, 128, %s354, %s341
        $region32: #{tpu_custom_call.1} parent=27 // pred_fallthru
          _
      $region28: #{tpu_custom_call.1} parent=5 // pred_fallthru
        _
      %p360 = scmp.le.s32.totalorder 2, %s11
      // Predicated region
      $region33: #{tpu_custom_call.1} parent=5 // pred_check
        %p361 = pneg %p360
      $region34: #{tpu_custom_call.1} parent=5 // pred_check_branch
        %363 = sbr.rel (%p361) target = $region36
      $region35: #{tpu_custom_call.1} parent=5 // pred_region
        %s364 = ssub.s32 %s11, 2
        // Predicated region
        $region37: #{tpu_custom_call.1} parent=35 // pred_check
          %p365 = pneg %p119
        $region38: #{tpu_custom_call.1} parent=35 // pred_check_branch
          %367 = sbr.rel (%p365) target = $region40
        $region39: #{tpu_custom_call.1} parent=35 // pred_region
          %s368 = sand.u32 %s104, 1
          %s369 = scalar_lea.sflag [#allocation3], %s368
          %s370 = sand.u32 %s104, 1
          %s371 = smul.addr %s370, 8
          %s372 = scalar_lea.vmem [#allocation2], %s371
          %373 = dma.done %s369, 128
        $region40: #{tpu_custom_call.1} parent=35 // pred_fallthru
          _
      $region36: #{tpu_custom_call.1} parent=5 // pred_fallthru
        _
    $region6: #{tpu_custom_call.1} parent=1 // loop_footer
      %s15 = sadd.s32 1, %s11
    $region7: #{tpu_custom_call.1} parent=1 // loop_footer_branch
      %10 = sbr.rel target = $region3
    $region8: #{tpu_custom_call.1} parent=1 // loop_exit
      _
    %374 = vsyncpa [#allocation3], 1
    %s375 = scalar_lea.sflag [#allocation3], 1
    %376 = vsyncpa %s375, 1

</llo_original>
